<compile_context>
chip_gen: v5e
topology: v5e:2x2
jax: 0.10.0
libtpu: 0.0.40
codegen_flags: <defaults>
</compile_context>

<pallas_src>
import functools

import numpy as np
import jax
import jax.numpy as jnp
from jax.experimental import pallas as pl
from jax.experimental.pallas import tpu as pltpu

LN_EPS = 1e-5  # torch.nn.LayerNorm default


def _round_up(n, m):
    return ((n + m - 1) // m) * m


@functools.lru_cache(maxsize=None)
def _single_buffer_supported():
    """Probe once whether pipeline_mode=pl.Buffered(1) compiles on this build."""
    def _probe(w_ref, o_ref):
        o_ref[...] = w_ref[...] + 1.0
    try:
        fn = pl.pallas_call(
            _probe,
            out_shape=jax.ShapeDtypeStruct((8, 128), jnp.float32),
            grid=(2,),
            in_specs=[pl.BlockSpec((8, 128), lambda i: (0, 0),
                                   pipeline_mode=pl.Buffered(1))],
            out_specs=pl.BlockSpec((8, 128), lambda i: (0, 0)),
        )
        jax.block_until_ready(fn(jnp.zeros((8, 128), jnp.float32)))
        return True
    except Exception:
        return False


@functools.lru_cache(maxsize=None)
def _device_config():
    """Generation-aware knobs: VMEM capacity, v7x (2 TCs), 256-wide MXU."""
    kind = ""
    try:
        kind = jax.devices()[0].device_kind.lower()
    except Exception:
        pass
    vmem_cap = None
    try:
        vmem_cap = int(pltpu.get_tpu_info().vmem_capacity_bytes)
    except Exception:
        vmem_cap = None
    if vmem_cap is None or vmem_cap <= 0:
        vmem_cap = 64 * 1024 * 1024 if "v7" in kind else 128 * 1024 * 1024
    is_v7x = "v7" in kind
    mxu_256 = not any(v in kind for v in ("v2", "v3", "v4", "v5"))
    return {"kind": kind, "vmem_cap": vmem_cap, "is_v7x": is_v7x,
            "mxu_256": mxu_256}


def init_mlp_params(key, input_size, num_units, num_layers):
    """Deterministic torch-like params. Weights stored transposed: (in, out).
    LayerNorm: gamma=1, beta=0."""
    params = []
    in_f = input_size
    for _ in range(num_layers):
        key, kw, kb = jax.random.split(key, 3)
        bound = 1.0 / jnp.sqrt(jnp.float32(in_f))
        w_t = jax.random.uniform(kw, (in_f, num_units), jnp.float32, -bound, bound)
        b = jax.random.uniform(kb, (num_units,), jnp.float32, -bound, bound)
        gamma = jnp.ones((num_units,), jnp.float32)
        beta = jnp.zeros((num_units,), jnp.float32)
        params.append((w_t, b, gamma, beta))
        in_f = num_units
    return params


def pack_mlp_params(params, *, use_bf16=True, lane_multiple=None):
    """Pack params into kernel slabs.

    Returns:
      w0_p:    (in8, U_p)              layer-0 weight (in8 = in rounded to 8)
      wrest_p: (max(L-1,1), U_p, U_p)  weights of layers 1..L-1
      pbg_p:   (L, 8, U_p) f32         rows 0/1/2 = bias/gamma/beta, rest zero

    Invariant (relied on by the unmasked LayerNorm sums in the kernel): padded
    weight columns, bias, gamma and beta lanes are ZERO by construction, so
    padded activation lanes stay exactly 0 through every layer.
    Weights are pre-cast to bf16 when use_bf16 (default) for the MXU fast path.
    """
    num_layers = len(params)
    in_f, num_units = params[0][0].shape
    cfg = _device_config()
    if lane_multiple is None:
        # 256-wide MXU gens (v6e/v7x): keep every matmul pass full when the
        # width needs padding anyway; don't 8x-inflate tiny widths though.
        lane_multiple = 256 if (cfg["mxu_256"] and num_units > 128) else 128
    in8 = _round_up(in_f, 8)                 # sublane pad only (cheap)
    u_p = _round_up(num_units, lane_multiple)
    w_dtype = jnp.bfloat16 if use_bf16 else jnp.float32

    w0_p = jnp.zeros((in8, u_p), jnp.float32).at[:in_f, :num_units].set(params[0][0])
    n_rest = max(num_layers - 1, 1)
    wrest_p = jnp.zeros((n_rest, u_p, u_p), jnp.float32)
    for l in range(1, num_layers):
        wrest_p = wrest_p.at[l - 1, :num_units, :num_units].set(params[l][0])
    pbg_p = jnp.zeros((num_layers, 8, u_p), jnp.float32)
    for l, (_, b, g, beta) in enumerate(params):
        pbg_p = pbg_p.at[l, 0, :num_units].set(b)
        pbg_p = pbg_p.at[l, 1, :num_units].set(g)
        pbg_p = pbg_p.at[l, 2, :num_units].set(beta)
    return w0_p.astype(w_dtype), wrest_p.astype(w_dtype), pbg_p


def _mlp_fused_kernel(x_ref, w0_ref, wrest_ref, pbg_ref, o_ref, *,
                      num_layers, num_units, mm_dtype):
    """All layers for one row-tile; activations never leave VMEM."""
    inv_n = 1.0 / float(num_units)

    def ln_relu(y, layer):
        pbg = pbg_ref[layer]                    # (8, U_p) f32
        bias, gamma, beta = pbg[0:1, :], pbg[1:2, :], pbg[2:3, :]
        y = y + bias                            # padded lanes stay exactly 0
        # One-pass LayerNorm statistics (single fused sweep). Padded lanes of
        # y are exactly 0, so unmasked sums over U_p equal sums over num_units
        # — no lane mask / iota needed at all.
        s1 = jnp.sum(y, axis=-1, keepdims=True)
        s2 = jnp.sum(y * y, axis=-1, keepdims=True)
        mean = s1 * inv_n
        var = jnp.maximum(s2 * inv_n - mean * mean, 0.0)
        y_n = (y - mean) * jax.lax.rsqrt(var + LN_EPS)
        # gamma/beta are 0 in padded lanes -> padded lanes remain exactly 0.
        return jnp.maximum(y_n * gamma + beta, 0.0)

    # Layer 0: (TM, in8) @ (in8, U_p); weights arrive already in mm_dtype.
    y = jnp.dot(x_ref[...].astype(mm_dtype), w0_ref[...],
                preferred_element_type=jnp.float32)
    y = ln_relu(y, 0)
    # Layers 1..L-1: (TM, U_p) @ (U_p, U_p).
    for l in range(1, num_layers):
        y = jnp.dot(y.astype(mm_dtype), wrest_ref[l - 1],
                    preferred_element_type=jnp.float32)
        y = ln_relu(y, l)
    # Store at the TRUE feature width (no post-kernel feature slice).
    o_ref[...] = y[:, :num_units].astype(o_ref.dtype)


@functools.partial(jax.jit, static_argnames=("num_units", "tile_rows",
                                              "single_buf", "vmem_limit",
                                              "out_dtype"))
def _mlp_forward_impl(x, w0_p, wrest_p, pbg_p, *, num_units, tile_rows,
                      single_buf, vmem_limit, out_dtype):
    lead = x.shape[:-1]
    in_features = x.shape[-1]
    in8, u_p = w0_p.shape
    num_layers = pbg_p.shape[0]

    x2d = x.reshape(-1, in_features)
    rows = x2d.shape[0]
    tr = tile_rows
    rows_p = _round_up(rows, tr)

    # Skip the XLA-side pad copy when rows/features already line up.
    if rows_p != rows or in8 != in_features:
        x_in = jnp.zeros((rows_p, in8), x2d.dtype).at[:rows, :in_features].set(x2d)
    else:
        x_in = x2d

    def const_spec(shape):
        idx = lambda i: (0,) * len(shape)
        if single_buf:
            # Constant across the grid -> single-buffer to halve VMEM footprint.
            return pl.BlockSpec(shape, idx, pipeline_mode=pl.Buffered(1))
        return pl.BlockSpec(shape, idx)

    kernel = functools.partial(_mlp_fused_kernel, num_layers=num_layers,
                               num_units=num_units, mm_dtype=w0_p.dtype)

    out_p = pl.pallas_call(
        kernel,
        out_shape=jax.ShapeDtypeStruct((rows_p, num_units), out_dtype),
        grid_spec=pltpu.PrefetchScalarGridSpec(
            num_scalar_prefetch=0,
            grid=(rows_p // tr,),
            in_specs=[
                pl.BlockSpec((tr, in8), lambda i: (i, 0)),   # x row tile
                const_spec((in8, u_p)),                      # layer-0 weight
                const_spec(tuple(wrest_p.shape)),            # weights 1..L-1
                const_spec(tuple(pbg_p.shape)),              # bias/gamma/beta
            ],
            out_specs=pl.BlockSpec((tr, num_units), lambda i: (i, 0)),
        ),
        compiler_params=pltpu.CompilerParams(
            dimension_semantics=("parallel",),
            vmem_limit_bytes=vmem_limit),
    )(x_in, w0_p, wrest_p, pbg_p)

    out = out_p if rows_p == rows else out_p[:rows]
    return out.reshape(*lead, num_units)


def mlp_forward(x, w0_p, wrest_p, pbg_p, *, num_units, tile_rows=None,
                out_dtype=None):
    """x: (*, input_size) -> (*, num_units). Params from pack_mlp_params.
    out_dtype=jnp.bfloat16 is recommended on v5e when the consumer tolerates it."""
    cfg = _device_config()
    single_buf = _single_buffer_supported()
    out_dtype = x.dtype if out_dtype is None else np.dtype(out_dtype)

    in8, u_p = w0_p.shape
    rows = 1
    for d in x.shape[:-1]:
        rows *= int(d)
    rows = max(rows, 1)

    # VMEM budget: resident weight slabs + double-buffered x/out row tiles +
    # f32 activation temporaries (headroom factor 6).
    w_bytes = (w0_p.size * w0_p.dtype.itemsize
               + wrest_p.size * wrest_p.dtype.itemsize
               + pbg_p.size * pbg_p.dtype.itemsize)
    w_bytes *= 1 if single_buf else 2
    per_row = (2 * (in8 * x.dtype.itemsize + num_units * out_dtype.itemsize)
               + 6 * u_p * 4)
    budget = int(cfg["vmem_cap"] * 0.8) - int(w_bytes)
    if budget <= per_row * 8:
        # TODO(synk): stream weight slabs layer-by-layer (extra "arbitrary"
        # grid axis) instead of keeping all of them VMEM-resident for very
        # large num_units / num_layers configurations.
        raise ValueError(
            f"MLP weights ({w_bytes / 2**20:.1f} MiB resident) leave no VMEM "
            f"for activations ({cfg['vmem_cap'] / 2**20:.0f} MiB capacity).")
    tr_cap = max(8, (budget // per_row) // 8 * 8)

    target = 1024 if tile_rows is None else int(tile_rows)
    tr = max(8, min(_round_up(target, 8), tr_cap, _round_up(rows, 8)))
    if cfg["is_v7x"] and rows > 8:
        # >=2 grid steps so the "parallel" rows axis can split across v7x's
        # two TensorCores (single-TC v5e/v6e unaffected).
        tr = min(tr, max(8, _round_up((rows + 1) // 2, 8)))

    # Generation-aware VMEM ask: ~54 MiB on v7x (64 MiB phys), ~108 MiB on
    # v5e/v6e (128 MiB phys), clamped to [32, 112] MiB.
    vmem_limit = max(32 * 1024 * 1024,
                     min(int(cfg["vmem_cap"] * 0.85), 112 * 1024 * 1024))

    return _mlp_forward_impl(x, w0_p, wrest_p, pbg_p, num_units=num_units,
                             tile_rows=tr, single_buf=single_buf,
                             vmem_limit=vmem_limit, out_dtype=out_dtype)


def _reference(x, params):
    """Pure-JAX reference matching torch Linear->LayerNorm->ReLU stacks."""
    y = x
    for (w_t, b, gamma, beta) in params:
        y = y @ w_t + b
        mean = jnp.mean(y, axis=-1, keepdims=True)
        var = jnp.mean((y - mean) ** 2, axis=-1, keepdims=True)
        y = (y - mean) / jnp.sqrt(var + LN_EPS)
        y = y * gamma + beta
        y = jnp.maximum(y, 0.0)
    return y


if __name__ == "__main__":
    BATCH, SEQ = 2, 8          # leading dims (*)
    INPUT_SIZE = 4
    NUM_UNITS = 32
    NUM_LAYERS = 3

    key = jax.random.PRNGKey(0)
    kx, kp = jax.random.split(key)
    x = jax.random.normal(kx, (BATCH, SEQ, INPUT_SIZE), jnp.float32)
    params = init_mlp_params(kp, INPUT_SIZE, NUM_UNITS, NUM_LAYERS)
    ref = _reference(x, params)

    # f32 weight path: must match the f32 reference tightly.
    w0_f, wr_f, pbg_f = pack_mlp_params(params, use_bf16=False)
    out_f = jax.block_until_ready(
        mlp_forward(x, w0_f, wr_f, pbg_f, num_units=NUM_UNITS))
    assert out_f.shape == (BATCH, SEQ, NUM_UNITS), out_f.shape
    assert jnp.allclose(out_f, ref, atol=1e-4, rtol=1e-4), \
        float(jnp.max(jnp.abs(out_f - ref)))

    # Default performance path: bf16 pre-cast weights / MXU matmuls, f32 LN.
    w0_b, wr_b, pbg_b = pack_mlp_params(params)   # use_bf16=True default
    out_b = jax.block_until_ready(
        mlp_forward(x, w0_b, wr_b, pbg_b, num_units=NUM_UNITS))
    assert out_b.shape == (BATCH, SEQ, NUM_UNITS), out_b.shape
    assert jnp.allclose(out_b, ref, atol=5e-2, rtol=5e-2), \
        float(jnp.max(jnp.abs(out_b - ref)))

    print("KERNEL_OK")
</pallas_src>

<mosaic_0001>
module attributes {stable_mosaic.version = 11 : i64} {
  func.func @_probe(%arg0: i32, %arg1: memref<8x128xf32, #tpu.memory_space<vmem>>, %arg2: memref<8x128xf32, #tpu.memory_space<vmem>>) attributes {dimension_semantics = [#tpu.dimension_semantics<arbitrary>], iteration_bounds = array<i64: 2>, scalar_prefetch = 0 : i64, scratch_operands = 0 : i64, tpu.core_type = #tpu.core_type<tc>, window_params = [{pipeline_mode = #tpu.pipeline_mode<synchronous>, transform_indices = @transform_0, window_bounds = array<i64: 8, 128>}, {pipeline_mode = #tpu.pipeline_mode<synchronous>, transform_indices = @transform_1, window_bounds = array<i64: 8, 128>}]} {
    %c0 = arith.constant 0 : index
    %c0_0 = arith.constant 0 : index
    %0 = vector.load %arg1[%c0, %c0_0] : memref<8x128xf32, #tpu.memory_space<vmem>>, vector<8x128xf32>
    %cst = arith.constant 1.000000e+00 : f32
    %1 = vector.broadcast %cst : f32 to vector<8x128xf32>
    %2 = arith.addf %0, %1 : vector<8x128xf32>
    %c0_1 = arith.constant 0 : index
    %c0_2 = arith.constant 0 : index
    %3 = vector.load %arg2[%c0_1, %c0_2] : memref<8x128xf32, #tpu.memory_space<vmem>>, vector<8x128xf32>
    tpu.vector_store %arg2[%c0_1, %c0_2], %2 {strides = array<i32>} : memref<8x128xf32, #tpu.memory_space<vmem>>, vector<8x128xf32>,
    return
  }
  func.func @transform_0(%arg0: i32) -> (i32, i32) {
    %c0_i32 = arith.constant 0 : i32
    %c0_i32_0 = arith.constant 0 : i32
    %c0_i32_1 = arith.constant 0 : i32
    return %c0_i32, %c0_i32_0 : i32, i32
  }
  func.func @transform_1(%arg0: i32) -> (i32, i32) {
    %c0_i32 = arith.constant 0 : i32
    %c0_i32_0 = arith.constant 0 : i32
    %c0_i32_1 = arith.constant 0 : i32
    return %c0_i32, %c0_i32_0 : i32, i32
  }
}

module attributes {stable_mosaic.version = 11 : i64} {
  func.func @_mlp_fused_kernel(%arg0: i32, %arg1: memref<16x8xf32, #tpu.memory_space<vmem>>, %arg2: memref<8x128xf32, #tpu.memory_space<vmem>>, %arg3: memref<2x128x128xf32, #tpu.memory_space<vmem>>, %arg4: memref<3x8x128xf32, #tpu.memory_space<vmem>>, %arg5: memref<16x32xf32, #tpu.memory_space<vmem>>) attributes {dimension_semantics = [#tpu.dimension_semantics<parallel>], iteration_bounds = array<i64: 1>, scalar_prefetch = 0 : i64, scratch_operands = 0 : i64, tpu.core_type = #tpu.core_type<tc>, window_params = [{transform_indices = @transform_0, window_bounds = array<i64: 16, 8>}, {pipeline_mode = #tpu.pipeline_mode<synchronous>, transform_indices = @transform_1, window_bounds = array<i64: 8, 128>}, {pipeline_mode = #tpu.pipeline_mode<synchronous>, transform_indices = @transform_2, window_bounds = array<i64: 2, 128, 128>}, {pipeline_mode = #tpu.pipeline_mode<synchronous>, transform_indices = @transform_3, window_bounds = array<i64: 3, 8, 128>}, {transform_indices = @transform_4, window_bounds = array<i64: 16, 32>}]} {
    %c0 = arith.constant 0 : index
    %c0_0 = arith.constant 0 : index
    %0 = vector.load %arg1[%c0, %c0_0] : memref<16x8xf32, #tpu.memory_space<vmem>>, vector<16x8xf32>
    %c0_1 = arith.constant 0 : index
    %c0_2 = arith.constant 0 : index
    %1 = vector.load %arg2[%c0_1, %c0_2] : memref<8x128xf32, #tpu.memory_space<vmem>>, vector<8x128xf32>
    %cst = arith.constant dense<0.000000e+00> : vector<16x128xf32>
    %2 = tpu.matmul %0, %1, %cst {dimension_numbers = #tpu.dot_dimension_numbers<[1], [0], [0], [1], [0, 0, 1, 1], [], []>} : vector<16x8xf32>, vector<8x128xf32>, vector<16x128xf32> -> vector<16x128xf32>
    %c0_3 = arith.constant 0 : index
    %c0_4 = arith.constant 0 : index
    %c0_5 = arith.constant 0 : index
    %3 = vector.load %arg4[%c0_3, %c0_4, %c0_5] : memref<3x8x128xf32, #tpu.memory_space<vmem>>, vector<1x8x128xf32>
    %4 = vector.shape_cast %3 : vector<1x8x128xf32> to vector<8x128xf32>
    %5 = vector.extract_strided_slice %4 {offsets = [0, 0], sizes = [1, 128], strides = [1, 1]} : vector<8x128xf32> to vector<1x128xf32>
    %6 = vector.extract_strided_slice %4 {offsets = [1, 0], sizes = [1, 128], strides = [1, 1]} : vector<8x128xf32> to vector<1x128xf32>
    %7 = vector.extract_strided_slice %4 {offsets = [2, 0], sizes = [1, 128], strides = [1, 1]} : vector<8x128xf32> to vector<1x128xf32>
    %8 = vector.broadcast %5 : vector<1x128xf32> to vector<16x128xf32>
    %9 = arith.addf %2, %8 : vector<16x128xf32>
    %cst_6 = arith.constant dense<0.000000e+00> : vector<16xf32>
    %10 = vector.multi_reduction <add>, %9, %cst_6 [1] : vector<16x128xf32> to vector<16xf32>
    %11 = vector.shape_cast %10 : vector<16xf32> to vector<16x1xf32>
    %12 = arith.mulf %9, %9 : vector<16x128xf32>
    %cst_7 = arith.constant dense<0.000000e+00> : vector<16xf32>
    %13 = vector.multi_reduction <add>, %12, %cst_7 [1] : vector<16x128xf32> to vector<16xf32>
    %14 = vector.shape_cast %13 : vector<16xf32> to vector<16x1xf32>
    %cst_8 = arith.constant 3.125000e-02 : f32
    %15 = vector.broadcast %cst_8 : f32 to vector<16x1xf32>
    %16 = arith.mulf %11, %15 : vector<16x1xf32>
    %cst_9 = arith.constant 3.125000e-02 : f32
    %17 = vector.broadcast %cst_9 : f32 to vector<16x1xf32>
    %18 = arith.mulf %14, %17 : vector<16x1xf32>
    %19 = arith.mulf %16, %16 : vector<16x1xf32>
    %20 = arith.subf %18, %19 : vector<16x1xf32>
    %cst_10 = arith.constant 0.000000e+00 : f32
    %21 = vector.broadcast %cst_10 : f32 to vector<16x1xf32>
    %22 = arith.maximumf %20, %21 : vector<16x1xf32>
    %23 = vector.broadcast %16 : vector<16x1xf32> to vector<16x128xf32>
    %24 = arith.subf %9, %23 : vector<16x128xf32>
    %cst_11 = arith.constant 9.99999974E-6 : f32
    %25 = vector.broadcast %cst_11 : f32 to vector<16x1xf32>
    %26 = arith.addf %22, %25 : vector<16x1xf32>
    %27 = math.rsqrt %26 : vector<16x1xf32>
    %28 = vector.broadcast %27 : vector<16x1xf32> to vector<16x128xf32>
    %29 = arith.mulf %24, %28 : vector<16x128xf32>
    %30 = vector.broadcast %6 : vector<1x128xf32> to vector<16x128xf32>
    %31 = arith.mulf %29, %30 : vector<16x128xf32>
    %32 = vector.broadcast %7 : vector<1x128xf32> to vector<16x128xf32>
    %33 = arith.addf %31, %32 : vector<16x128xf32>
    %cst_12 = arith.constant 0.000000e+00 : f32
    %34 = vector.broadcast %cst_12 : f32 to vector<16x128xf32>
    %35 = arith.maximumf %33, %34 : vector<16x128xf32>
    %c0_13 = arith.constant 0 : index
    %c0_14 = arith.constant 0 : index
    %c0_15 = arith.constant 0 : index
    %36 = vector.load %arg3[%c0_13, %c0_14, %c0_15] : memref<2x128x128xf32, #tpu.memory_space<vmem>>, vector<1x128x128xf32>
    %37 = vector.shape_cast %36 : vector<1x128x128xf32> to vector<128x128xf32>
    %cst_16 = arith.constant dense<0.000000e+00> : vector<16x128xf32>
    %38 = tpu.matmul %35, %37, %cst_16 {dimension_numbers = #tpu.dot_dimension_numbers<[1], [0], [0], [1], [0, 0, 1, 1], [], []>} : vector<16x128xf32>, vector<128x128xf32>, vector<16x128xf32> -> vector<16x128xf32>
    %c1 = arith.constant 1 : index
    %c0_17 = arith.constant 0 : index
    %c0_18 = arith.constant 0 : index
    %39 = vector.load %arg4[%c1, %c0_17, %c0_18] : memref<3x8x128xf32, #tpu.memory_space<vmem>>, vector<1x8x128xf32>
    %40 = vector.shape_cast %39 : vector<1x8x128xf32> to vector<8x128xf32>
    %41 = vector.extract_strided_slice %40 {offsets = [0, 0], sizes = [1, 128], strides = [1, 1]} : vector<8x128xf32> to vector<1x128xf32>
    %42 = vector.extract_strided_slice %40 {offsets = [1, 0], sizes = [1, 128], strides = [1, 1]} : vector<8x128xf32> to vector<1x128xf32>
    %43 = vector.extract_strided_slice %40 {offsets = [2, 0], sizes = [1, 128], strides = [1, 1]} : vector<8x128xf32> to vector<1x128xf32>
    %44 = vector.broadcast %41 : vector<1x128xf32> to vector<16x128xf32>
    %45 = arith.addf %38, %44 : vector<16x128xf32>
    %cst_19 = arith.constant dense<0.000000e+00> : vector<16xf32>
    %46 = vector.multi_reduction <add>, %45, %cst_19 [1] : vector<16x128xf32> to vector<16xf32>
    %47 = vector.shape_cast %46 : vector<16xf32> to vector<16x1xf32>
    %48 = arith.mulf %45, %45 : vector<16x128xf32>
    %cst_20 = arith.constant dense<0.000000e+00> : vector<16xf32>
    %49 = vector.multi_reduction <add>, %48, %cst_20 [1] : vector<16x128xf32> to vector<16xf32>
    %50 = vector.shape_cast %49 : vector<16xf32> to vector<16x1xf32>
    %cst_21 = arith.constant 3.125000e-02 : f32
    %51 = vector.broadcast %cst_21 : f32 to vector<16x1xf32>
    %52 = arith.mulf %47, %51 : vector<16x1xf32>
    %cst_22 = arith.constant 3.125000e-02 : f32
    %53 = vector.broadcast %cst_22 : f32 to vector<16x1xf32>
    %54 = arith.mulf %50, %53 : vector<16x1xf32>
    %55 = arith.mulf %52, %52 : vector<16x1xf32>
    %56 = arith.subf %54, %55 : vector<16x1xf32>
    %cst_23 = arith.constant 0.000000e+00 : f32
    %57 = vector.broadcast %cst_23 : f32 to vector<16x1xf32>
    %58 = arith.maximumf %56, %57 : vector<16x1xf32>
    %59 = vector.broadcast %52 : vector<16x1xf32> to vector<16x128xf32>
    %60 = arith.subf %45, %59 : vector<16x128xf32>
    %cst_24 = arith.constant 9.99999974E-6 : f32
    %61 = vector.broadcast %cst_24 : f32 to vector<16x1xf32>
    %62 = arith.addf %58, %61 : vector<16x1xf32>
    %63 = math.rsqrt %62 : vector<16x1xf32>
    %64 = vector.broadcast %63 : vector<16x1xf32> to vector<16x128xf32>
    %65 = arith.mulf %60, %64 : vector<16x128xf32>
    %66 = vector.broadcast %42 : vector<1x128xf32> to vector<16x128xf32>
    %67 = arith.mulf %65, %66 : vector<16x128xf32>
    %68 = vector.broadcast %43 : vector<1x128xf32> to vector<16x128xf32>
    %69 = arith.addf %67, %68 : vector<16x128xf32>
    %cst_25 = arith.constant 0.000000e+00 : f32
    %70 = vector.broadcast %cst_25 : f32 to vector<16x128xf32>
    %71 = arith.maximumf %69, %70 : vector<16x128xf32>
    %c1_26 = arith.constant 1 : index
    %c0_27 = arith.constant 0 : index
    %c0_28 = arith.constant 0 : index
    %72 = vector.load %arg3[%c1_26, %c0_27, %c0_28] : memref<2x128x128xf32, #tpu.memory_space<vmem>>, vector<1x128x128xf32>
    %73 = vector.shape_cast %72 : vector<1x128x128xf32> to vector<128x128xf32>
    %cst_29 = arith.constant dense<0.000000e+00> : vector<16x128xf32>
    %74 = tpu.matmul %71, %73, %cst_29 {dimension_numbers = #tpu.dot_dimension_numbers<[1], [0], [0], [1], [0, 0, 1, 1], [], []>} : vector<16x128xf32>, vector<128x128xf32>, vector<16x128xf32> -> vector<16x128xf32>
    %c2 = arith.constant 2 : index
    %c0_30 = arith.constant 0 : index
    %c0_31 = arith.constant 0 : index
    %75 = vector.load %arg4[%c2, %c0_30, %c0_31] : memref<3x8x128xf32, #tpu.memory_space<vmem>>, vector<1x8x128xf32>
    %76 = vector.shape_cast %75 : vector<1x8x128xf32> to vector<8x128xf32>
    %77 = vector.extract_strided_slice %76 {offsets = [0, 0], sizes = [1, 128], strides = [1, 1]} : vector<8x128xf32> to vector<1x128xf32>
    %78 = vector.extract_strided_slice %76 {offsets = [1, 0], sizes = [1, 128], strides = [1, 1]} : vector<8x128xf32> to vector<1x128xf32>
    %79 = vector.extract_strided_slice %76 {offsets = [2, 0], sizes = [1, 128], strides = [1, 1]} : vector<8x128xf32> to vector<1x128xf32>
    %80 = vector.broadcast %77 : vector<1x128xf32> to vector<16x128xf32>
    %81 = arith.addf %74, %80 : vector<16x128xf32>
    %cst_32 = arith.constant dense<0.000000e+00> : vector<16xf32>
    %82 = vector.multi_reduction <add>, %81, %cst_32 [1] : vector<16x128xf32> to vector<16xf32>
    %83 = vector.shape_cast %82 : vector<16xf32> to vector<16x1xf32>
    %84 = arith.mulf %81, %81 : vector<16x128xf32>
    %cst_33 = arith.constant dense<0.000000e+00> : vector<16xf32>
    %85 = vector.multi_reduction <add>, %84, %cst_33 [1] : vector<16x128xf32> to vector<16xf32>
    %86 = vector.shape_cast %85 : vector<16xf32> to vector<16x1xf32>
    %cst_34 = arith.constant 3.125000e-02 : f32
    %87 = vector.broadcast %cst_34 : f32 to vector<16x1xf32>
    %88 = arith.mulf %83, %87 : vector<16x1xf32>
    %cst_35 = arith.constant 3.125000e-02 : f32
    %89 = vector.broadcast %cst_35 : f32 to vector<16x1xf32>
    %90 = arith.mulf %86, %89 : vector<16x1xf32>
    %91 = arith.mulf %88, %88 : vector<16x1xf32>
    %92 = arith.subf %90, %91 : vector<16x1xf32>
    %cst_36 = arith.constant 0.000000e+00 : f32
    %93 = vector.broadcast %cst_36 : f32 to vector<16x1xf32>
    %94 = arith.maximumf %92, %93 : vector<16x1xf32>
    %95 = vector.broadcast %88 : vector<16x1xf32> to vector<16x128xf32>
    %96 = arith.subf %81, %95 : vector<16x128xf32>
    %cst_37 = arith.constant 9.99999974E-6 : f32
    %97 = vector.broadcast %cst_37 : f32 to vector<16x1xf32>
    %98 = arith.addf %94, %97 : vector<16x1xf32>
    %99 = math.rsqrt %98 : vector<16x1xf32>
    %100 = vector.broadcast %99 : vector<16x1xf32> to vector<16x128xf32>
    %101 = arith.mulf %96, %100 : vector<16x128xf32>
    %102 = vector.broadcast %78 : vector<1x128xf32> to vector<16x128xf32>
    %103 = arith.mulf %101, %102 : vector<16x128xf32>
    %104 = vector.broadcast %79 : vector<1x128xf32> to vector<16x128xf32>
    %105 = arith.addf %103, %104 : vector<16x128xf32>
    %cst_38 = arith.constant 0.000000e+00 : f32
    %106 = vector.broadcast %cst_38 : f32 to vector<16x128xf32>
    %107 = arith.maximumf %105, %106 : vector<16x128xf32>
    %108 = vector.extract_strided_slice %107 {offsets = [0, 0], sizes = [16, 32], strides = [1, 1]} : vector<16x128xf32> to vector<16x32xf32>
    %c0_39 = arith.constant 0 : index
    %c0_40 = arith.constant 0 : index
    %109 = vector.load %arg5[%c0_39, %c0_40] : memref<16x32xf32, #tpu.memory_space<vmem>>, vector<16x32xf32>
    tpu.vector_store %arg5[%c0_39, %c0_40], %108 {strides = array<i32>} : memref<16x32xf32, #tpu.memory_space<vmem>>, vector<16x32xf32>,
    return
  }
  func.func @transform_0(%arg0: i32) -> (i32, i32) {
    %c0_i32 = arith.constant 0 : i32
    %c0_i32_0 = arith.constant 0 : i32
    return %arg0, %c0_i32 : i32, i32
  }
  func.func @transform_1(%arg0: i32) -> (i32, i32) {
    %c0_i32 = arith.constant 0 : i32
    %c0_i32_0 = arith.constant 0 : i32
    %c0_i32_1 = arith.constant 0 : i32
    return %c0_i32, %c0_i32_0 : i32, i32
  }
  func.func @transform_2(%arg0: i32) -> (i32, i32, i32) {
    %c0_i32 = arith.constant 0 : i32
    %c0_i32_0 = arith.constant 0 : i32
    %c0_i32_1 = arith.constant 0 : i32
    %c0_i32_2 = arith.constant 0 : i32
    return %c0_i32, %c0_i32_0, %c0_i32_1 : i32, i32, i32
  }
  func.func @transform_3(%arg0: i32) -> (i32, i32, i32) {
    %c0_i32 = arith.constant 0 : i32
    %c0_i32_0 = arith.constant 0 : i32
    %c0_i32_1 = arith.constant 0 : i32
    %c0_i32_2 = arith.constant 0 : i32
    return %c0_i32, %c0_i32_0, %c0_i32_1 : i32, i32, i32
  }
  func.func @transform_4(%arg0: i32) -> (i32, i32) {
    %c0_i32 = arith.constant 0 : i32
    %c0_i32_0 = arith.constant 0 : i32
    return %arg0, %c0_i32 : i32, i32
  }
}

</mosaic_0001>

<llo_original>
// kernel: tpu_custom_call.1
$region0: #{tpu_custom_call.1}
  #allocation0 [shape = 'u32[]', space=smem, size = 0x4, offset = 0x4, fixed_abs, tag = 'smem constant byte address 0x4 - core index']
  #allocation1 [shape = 'u32[72,128]{1,0:T(1,128)}', space=vmem, size = 0x9000, scoped, tag = 'internal scratch']
  %s0 = inlined_call_operand.hbm [shape: f32[8,128], index: 0, kind: input, shape index: {}]
  %s1 = inlined_call_operand.hbm [shape: f32[8,128], index: 1, kind: output, shape index: {}]
  %s2 = sld [smem:[#allocation0]]
  $region41: #{tpu_custom_call.1} parent=0
    _
  %s4 = ssub.s32 1, %s2
  %s5 = scalar_select 0, %s4, %s2
  $region1: #{tpu_custom_call.1} parent=0
    #allocation2 [shape = 'u8[4096]{0}', space=vmem, size = 0x1000, scoped, tag = 'input window, operand 0, single buffered']
    #allocation3 [shape = 's32[2]{0}', space=sflag, size = 0x8, scoped, tag = 'scoped memory for tpu_custom_call.1']
    #allocation4 [shape = 's32[2]{0}', space=sflag, size = 0x8, scoped, tag = 'scoped memory for tpu_custom_call.1']
    #allocation5 [shape = 'u8[4096]{0}', space=vmem, size = 0x1000, scoped, tag = 'output window, operand 0, single buffered']
    %6 = vsyncpa [#allocation3], 0
    %7 = vsyncpa [#allocation4], 0
    loop: start=0, step=1, limit=4
    $region2: #{tpu_custom_call.1} parent=1 // loop_pre_header
      _
    $region3: #{tpu_custom_call.1} parent=1 // loop_header
      %s9 = sphi 0, %s13
      %p10 = scmp.ge.s32.totalorder %s9, 4
      %s17 = sphi 0, %s17
      %s19 = sphi 0, %s17
      %s20 = sphi 0, %s19
      %s34 = sphi 0, %s20
      %s38 = sphi 0, %s38
      %s40 = sphi 0, %s38
      %s41 = sphi 0, %s40
      %s55 = sphi 0, %s41
    $region4: #{tpu_custom_call.1} parent=1 // loop_header_branch
      %12 = sbr.rel (%p10) target = $region8
    $region5: #{tpu_custom_call.1} parent=1 // loop_body
      %s14 = ssub.s32 %s9, 1
      %s15 = ssub.s32 %s9, 2
      %s16 = sadd.s32 %s9, 1
      %s18 = sadd.s32 %s17, 1
      %p21 = scmp.eq.s32.totalorder %s9, 1
      %p22 = scmp.ne.s32.totalorder %s17, %s19
      %p23 = scmp.eq.s32.totalorder %s9, 0
      %p24 = por %p22, %p23
      %p25 = scmp.ne.s32.totalorder %s17, %s19
      %p26 = scmp.eq.s32.totalorder %s14, 1
      %p27 = por %p25, %p26
      %p28 = scmp.ne.s32.totalorder %s19, %s20
      %p29 = scmp.eq.s32.totalorder %s14, 0
      %p30 = por %p28, %p29
      %p31 = scmp.ne.s32.totalorder %s19, %s20
      %p32 = scmp.eq.s32.totalorder %s15, 1
      %p33 = por %p31, %p32
      %p35 = scmp.ne.s32.totalorder %s20, %s34
      %p36 = scmp.eq.s32.totalorder %s15, 0
      %p37 = por %p35, %p36
      %s39 = sadd.s32 %s38, 1
      %p42 = scmp.eq.s32.totalorder %s9, 1
      %p43 = scmp.ne.s32.totalorder %s38, %s40
      %p44 = scmp.eq.s32.totalorder %s9, 0
      %p45 = por %p43, %p44
      %p46 = scmp.ne.s32.totalorder %s38, %s40
      %p47 = scmp.eq.s32.totalorder %s14, 1
      %p48 = por %p46, %p47
      %p49 = scmp.ne.s32.totalorder %s40, %s41
      %p50 = scmp.eq.s32.totalorder %s14, 0
      %p51 = por %p49, %p50
      %p52 = scmp.ne.s32.totalorder %s40, %s41
      %p53 = scmp.eq.s32.totalorder %s15, 1
      %p54 = por %p52, %p53
      %p56 = scmp.ne.s32.totalorder %s41, %s55
      %p57 = scmp.eq.s32.totalorder %s15, 0
      %p58 = por %p56, %p57
      %p59 = scmp.le.s32.totalorder 1, %s9
      %p60 = scmp.lt.s32.totalorder %s9, 3
      %p61 = pnand %p59, %p60
      %p62 = pneg %p61
      // Predicated region
      $region9: #{tpu_custom_call.1} parent=5 // pred_check
        _
      $region10: #{tpu_custom_call.1} parent=5 // pred_check_branch
        %64 = sbr.rel (%p61) target = $region12
      $region11: #{tpu_custom_call.1} parent=5 // pred_region
        %s65 = ssub.s32 %s9, 1
        // Predicated region
        $region13: #{tpu_custom_call.1} parent=11 // pred_check
          %p66 = pneg %p30
        $region14: #{tpu_custom_call.1} parent=11 // pred_check_branch
          %68 = sbr.rel (%p66) target = $region16
        $region15: #{tpu_custom_call.1} parent=11 // pred_region
          %70 = vsyncadd [#allocation3], 0
          %s72 = sshll.u32 %s0, 4
          %s73 = int_to_ptr.hbm [resolvable:$true] %s72
          %s74 = sshll.u32 [#allocation2], 4
          %s75 = int_to_ptr.vmem [resolvable:$true] %s74
          %77 = dma.hbm_to_vmem [thread:$0]  %s73, 128, %s75, [#allocation3]
        $region16: #{tpu_custom_call.1} parent=11 // pred_fallthru
          _
      $region12: #{tpu_custom_call.1} parent=5 // pred_fallthru
        _
      %p78 = scmp.lt.s32.totalorder %s9, 2
      // Predicated region
      $region17: #{tpu_custom_call.1} parent=5 // pred_check
        %p79 = pneg %p78
      $region18: #{tpu_custom_call.1} parent=5 // pred_check_branch
        %81 = sbr.rel (%p79) target = $region20
      $region19: #{tpu_custom_call.1} parent=5 // pred_region
        _
      $region20: #{tpu_custom_call.1} parent=5 // pred_fallthru
        _
      %p82 = scmp.le.s32.totalorder 1, %s9
      %p83 = scmp.lt.s32.totalorder %s9, 3
      %p84 = pnand %p82, %p83
      %p85 = pneg %p84
      // Predicated region
      $region21: #{tpu_custom_call.1} parent=5 // pred_check
        _
      $region22: #{tpu_custom_call.1} parent=5 // pred_check_branch
        %87 = sbr.rel (%p84) target = $region24
      $region23: #{tpu_custom_call.1} parent=5 // pred_region
        %s88 = ssub.s32 %s9, 1
        // Predicated region
        $region25: #{tpu_custom_call.1} parent=23 // pred_check
          %p89 = pneg %p30
        $region26: #{tpu_custom_call.1} parent=23 // pred_check_branch
          %91 = sbr.rel (%p89) target = $region28
        $region27: #{tpu_custom_call.1} parent=23 // pred_region
          %93 = dma.done [#allocation3], 128
        $region28: #{tpu_custom_call.1} parent=23 // pred_fallthru
          _
        %p94 = pneg %p30
        %p95 = pneg %p27
        %p96 = pneg %p51
        %p97 = pneg %p48
        %v98 = vld [vmem:[#allocation2] sm:$0xff]
        %v99 = vadd.f32 %v98, 1.0
        %100 = vst [vmem:[#allocation5] sm:$0xff] %v99
        // Predicated region
        $region29: #{tpu_custom_call.1} parent=23 // pred_check
          %p101 = pneg %p48
        $region30: #{tpu_custom_call.1} parent=23 // pred_check_branch
          %103 = sbr.rel (%p101) target = $region32
        $region31: #{tpu_custom_call.1} parent=23 // pred_region
          %105 = vsyncadd [#allocation4], 0
          %s107 = sshll.u32 [#allocation5], 4
          %s108 = int_to_ptr.vmem [resolvable:$true] %s107
          %s109 = sshll.u32 %s1, 4
          %s110 = int_to_ptr.hbm [resolvable:$true] %s109
          %112 = dma.vmem_to_hbm [thread:$0]  %s108, 128, %s110, [#allocation4]
        $region32: #{tpu_custom_call.1} parent=23 // pred_fallthru
          _
        // Predicated region
        $region33: #{tpu_custom_call.1} parent=23 // pred_check
          %p113 = pneg %p48
        $region34: #{tpu_custom_call.1} parent=23 // pred_check_branch
          %115 = sbr.rel (%p113) target = $region36
        $region35: #{tpu_custom_call.1} parent=23 // pred_region
          %117 = dma.done [#allocation4], 128
        $region36: #{tpu_custom_call.1} parent=23 // pred_fallthru
          _
      $region24: #{tpu_custom_call.1} parent=5 // pred_fallthru
        _
      %p118 = scmp.le.s32.totalorder 2, %s9
      // Predicated region
      $region37: #{tpu_custom_call.1} parent=5 // pred_check
        %p119 = pneg %p118
      $region38: #{tpu_custom_call.1} parent=5 // pred_check_branch
        %121 = sbr.rel (%p119) target = $region40
      $region39: #{tpu_custom_call.1} parent=5 // pred_region
        %s122 = ssub.s32 %s9, 2
      $region40: #{tpu_custom_call.1} parent=5 // pred_fallthru
        _
    $region6: #{tpu_custom_call.1} parent=1 // loop_footer
      %s13 = sadd.s32 1, %s9
    $region7: #{tpu_custom_call.1} parent=1 // loop_footer_branch
      %8 = sbr.rel target = $region3
    $region8: #{tpu_custom_call.1} parent=1 // loop_exit
      _
    %123 = vsyncpa [#allocation3], 1
    %s124 = scalar_lea.sflag [#allocation3], 1
    %125 = vsyncpa %s124, 1
    %126 = vsyncpa [#allocation4], 1
    %s127 = scalar_lea.sflag [#allocation4], 1
    %128 = vsyncpa %s127, 1

// kernel: _mlp_forward_impl.1
$region0: #{_mlp_forward_impl.1}
  #allocation0 [shape = 'u32[]', space=smem, size = 0x4, offset = 0x4, fixed_abs, tag = 'smem constant byte address 0x4 - core index']
  #allocation1 [shape = 'u32[72,128]{1,0:T(1,128)}', space=vmem, size = 0x9000, scoped, tag = 'internal scratch']
  %s0 = inlined_call_operand.vmem [shape: f32[16,8], index: 0, kind: input, shape index: {}]
  %s1 = inlined_call_operand.vmem [shape: f32[8,128], index: 1, kind: input, shape index: {}]
  %s2 = inlined_call_operand.hbm [shape: f32[2,128,128], index: 2, kind: input, shape index: {}]
  %s3 = inlined_call_operand.vmem [shape: f32[3,8,128], index: 3, kind: input, shape index: {}]
  %s4 = inlined_call_operand.hbm [shape: f32[16,32], index: 4, kind: output, shape index: {}]
  %s5 = sld [smem:[#allocation0]]
  $region30: #{_mlp_forward_impl.1} parent=0
    _
  %s7 = ssub.s32 1, %s5
  %s8 = scalar_select 0, %s7, %s5
  $region1: #{_mlp_forward_impl.1} parent=0
    #allocation2 [shape = 'u8[131072]{0}', space=vmem, size = 0x20000, scoped, tag = 'input window, operand 2, single buffered']
    #allocation3 [shape = 's32[1]{0}', space=sflag, size = 0x4, scoped, tag = 'scoped memory for _mlp_forward_impl.1']
    #allocation4 [shape = 's32[1]{0}', space=sflag, size = 0x4, scoped, tag = 'scoped memory for _mlp_forward_impl.1']
    #allocation5 [shape = 'u8[8192]{0}', space=vmem, size = 0x2000, scoped, tag = 'output window, operand 0, single buffered']
    %9 = vsyncpa [#allocation3], 0
    %10 = vsyncpa [#allocation4], 0
    // Predicated region
    $region2: #{_mlp_forward_impl.1} parent=1 // pred_check
      _
    $region3: #{_mlp_forward_impl.1} parent=1 // pred_check_branch
      %12 = sbr.rel (0) target = $region5
    $region4: #{_mlp_forward_impl.1} parent=1 // pred_region
      _
    $region5: #{_mlp_forward_impl.1} parent=1 // pred_fallthru
      _
    // Predicated region
    $region6: #{_mlp_forward_impl.1} parent=1 // pred_check
      _
    $region7: #{_mlp_forward_impl.1} parent=1 // pred_check_branch
      %14 = sbr.rel (0) target = $region9
    $region8: #{_mlp_forward_impl.1} parent=1 // pred_region
      _
    $region9: #{_mlp_forward_impl.1} parent=1 // pred_fallthru
      _
    // Predicated region
    $region10: #{_mlp_forward_impl.1} parent=1 // pred_check
      _
    $region11: #{_mlp_forward_impl.1} parent=1 // pred_check_branch
      %16 = sbr.rel (0) target = $region13
    $region12: #{_mlp_forward_impl.1} parent=1 // pred_region
      %18 = vsyncadd [#allocation3], 0
      %s19 = sshll.u32 %s2, 4
      %s20 = int_to_ptr.hbm [resolvable:$true] %s19
      %s21 = sshll.u32 [#allocation2], 4
      %s22 = int_to_ptr.vmem [resolvable:$true] %s21
      %27 = dma.hbm_to_vmem [thread:$0]  %s20, 4096, %s22, [#allocation3], 128, 128, 8
    $region13: #{_mlp_forward_impl.1} parent=1 // pred_fallthru
      _
    // Predicated region
    $region14: #{_mlp_forward_impl.1} parent=1 // pred_check
      _
    $region15: #{_mlp_forward_impl.1} parent=1 // pred_check_branch
      %29 = sbr.rel (0) target = $region17
    $region16: #{_mlp_forward_impl.1} parent=1 // pred_region
      _
    $region17: #{_mlp_forward_impl.1} parent=1 // pred_fallthru
      _
    // Predicated region
    $region18: #{_mlp_forward_impl.1} parent=1 // pred_check
      _
    $region19: #{_mlp_forward_impl.1} parent=1 // pred_check_branch
      %31 = sbr.rel (0) target = $region21
    $region20: #{_mlp_forward_impl.1} parent=1 // pred_region
      %33 = dma.done [#allocation3], 4096
    $region21: #{_mlp_forward_impl.1} parent=1 // pred_fallthru
      _
    %v34 = vld [vmem:[%s0] sm:$0xff]
    %v35 = vld [vmem:[%s0 + $0x8] sm:$0xff]
    %v36 = vld [vmem:[%s1] sm:$0xff]
    %v37 = vld [vmem:[%s3] sm:$0xff]
    %v38 = vperm.slane %v37, 0
    %vm39 = vcmask 64512
    %v41 = vsel %vm39, %v34, 0
    %v44 = vsel %vm39, %v35, 0
    %46 = vmatpush.msra.mxu0 0.0
    %47 = vmatpush.msra.mxu0 0.0
    %48 = vmatpush.msra.mxu0 0.0
    %49 = vmatpush.msra.mxu0 0.0
    %50 = vmatpush.msra.mxu0 0.0
    %51 = vmatpush.msra.mxu0 0.0
    %52 = vmatpush.msra.mxu0 0.0
    %53 = vmatpush.msra.mxu0 0.0
    %54 = vmatpush.msra.mxu0 0.0
    %55 = vmatpush.msra.mxu0 0.0
    %56 = vmatpush.msra.mxu0 0.0
    %57 = vmatpush.msra.mxu0 0.0
    %58 = vmatpush.msra.mxu0 0.0
    %59 = vmatpush.msra.mxu0 0.0
    %60 = vmatpush.msra.mxu0 0.0
    %61 = vmatpush.msra.mxu0 %v36
    %62 = vmatmul.f32.gmra.mxu0 %v41
    %v63 = vpop.f32.mrf.mxu0
    %v64 = vadd.f32 %v38, %v63
    %65 = vmatmul.f32.gmra.mxu0 %v44
    %v66 = vpop.f32.mrf.mxu0
    %v67 = vadd.f32 %v38, %v66
    %68 = vdwg.mxu0
    %69 = vadd.xlane.f32.xlu0 %v64
    %v70 = vpop.xlane.xlu0 %69
    %71 = vadd.xlane.f32.xlu0 %v67
    %v72 = vpop.xlane.xlu0 %71
    %v73 = vmul.f32 %v64, %v64
    %v74 = vmul.f32 %v67, %v67
    %75 = vadd.xlane.f32.xlu0 %v73
    %v76 = vpop.xlane.xlu0 %75
    %77 = vadd.xlane.f32.xlu0 %v74
    %v78 = vpop.xlane.xlu0 %77
    %v79 = vmul.f32 %v70, 0.03125
    %v80 = vmul.f32 %v72, 0.03125
    %v81 = vmul.f32 %v76, 0.03125
    %v82 = vmul.f32 %v78, 0.03125
    %v83 = vmul.f32 %v79, %v79
    %v84 = vmul.f32 %v80, %v80
    %v85 = vsub.f32 %v81, %v83
    %v86 = vsub.f32 %v82, %v84
    %v87 = vmax.f32 %v85, 0.0
    %v88 = vmax.f32 %v86, 0.0
    %v89 = vsub.f32 %v64, %v79
    %v90 = vsub.f32 %v67, %v80
    %v91 = vadd.f32 %v87, 1e-05
    %v92 = vadd.f32 %v88, 1e-05
    %v93 = vrsqrt.pop %v91
    %v94 = vmul.f32 %v93, %v91
    %v95 = vmul.f32 %v94, %v93
    %v96 = vmul.f32 0.5, %v95
    %v97 = vsub.f32 1.5, %v96
    %v98 = vmul.f32 %v93, %v97
    %vm99 = vweird.f32 %v91
    %vm100 = vweird.f32 %v93
    %vm101 = vmor %vm99, %vm100
    %v102 = vsel %vm101, %v93, %v98
    %v103 = vrsqrt.pop %v92
    %v104 = vmul.f32 %v103, %v92
    %v105 = vmul.f32 %v104, %v103
    %v106 = vmul.f32 0.5, %v105
    %v107 = vsub.f32 1.5, %v106
    %v108 = vmul.f32 %v103, %v107
    %vm109 = vweird.f32 %v92
    %vm110 = vweird.f32 %v103
    %vm111 = vmor %vm109, %vm110
    %v112 = vsel %vm111, %v103, %v108
    %v113 = vmul.f32 %v89, %v102
    %v114 = vmul.f32 %v90, %v112
    %v115 = vperm.slane %v37, 1
    %v116 = vmul.f32 %v113, %v115
    %v117 = vmul.f32 %v114, %v115
    %v118 = vperm.slane %v37, 2
    %v119 = vadd.f32 %v116, %v118
    %v120 = vadd.f32 %v117, %v118
    %v121 = vmax.f32 %v119, 0.0
    %v122 = vmax.f32 %v120, 0.0
    %v123 = vld [vmem:[#allocation2] sm:$0xff]
    %v124 = vld [vmem:[#allocation2 + $0x8] sm:$0xff]
    %v125 = vld [vmem:[#allocation2 + $0x10] sm:$0xff]
    %v126 = vld [vmem:[#allocation2 + $0x18] sm:$0xff]
    %v127 = vld [vmem:[#allocation2 + $0x20] sm:$0xff]
    %v128 = vld [vmem:[#allocation2 + $0x28] sm:$0xff]
    %v129 = vld [vmem:[#allocation2 + $0x30] sm:$0xff]
    %v130 = vld [vmem:[#allocation2 + $0x38] sm:$0xff]
    %v131 = vld [vmem:[#allocation2 + $0x40] sm:$0xff]
    %v132 = vld [vmem:[#allocation2 + $0x48] sm:$0xff]
    %v133 = vld [vmem:[#allocation2 + $0x50] sm:$0xff]
    %v134 = vld [vmem:[#allocation2 + $0x58] sm:$0xff]
    %v135 = vld [vmem:[#allocation2 + $0x60] sm:$0xff]
    %v136 = vld [vmem:[#allocation2 + $0x68] sm:$0xff]
    %v137 = vld [vmem:[#allocation2 + $0x70] sm:$0xff]
    %v138 = vld [vmem:[#allocation2 + $0x78] sm:$0xff]
    %s139 = scalar_lea.vmem %s3, 8
    %v140 = vld [vmem:[%s139] sm:$0xff]
    %v141 = vperm.slane %v140, 0
    %142 = vmatpush.msra.mxu0 %v138
    %143 = vmatpush.msra.mxu0 %v137
    %144 = vmatpush.msra.mxu0 %v136
    %145 = vmatpush.msra.mxu0 %v135
    %146 = vmatpush.msra.mxu0 %v134
    %147 = vmatpush.msra.mxu0 %v133
    %148 = vmatpush.msra.mxu0 %v132
    %149 = vmatpush.msra.mxu0 %v131
    %150 = vmatpush.msra.mxu0 %v130
    %151 = vmatpush.msra.mxu0 %v129
    %152 = vmatpush.msra.mxu0 %v128
    %153 = vmatpush.msra.mxu0 %v127
    %154 = vmatpush.msra.mxu0 %v126
    %155 = vmatpush.msra.mxu0 %v125
    %156 = vmatpush.msra.mxu0 %v124
    %157 = vmatpush.msra.mxu0 %v123
    %158 = vmatmul.f32.gmra.mxu0 %v121
    %v159 = vpop.f32.mrf.mxu0
    %v160 = vadd.f32 %v141, %v159
    %161 = vmatmul.f32.gmra.mxu0 %v122
    %v162 = vpop.f32.mrf.mxu0
    %v163 = vadd.f32 %v141, %v162
    %164 = vdwg.mxu0
    %165 = vadd.xlane.f32.xlu0 %v160
    %v166 = vpop.xlane.xlu0 %165
    %167 = vadd.xlane.f32.xlu0 %v163
    %v168 = vpop.xlane.xlu0 %167
    %v169 = vmul.f32 %v160, %v160
    %v170 = vmul.f32 %v163, %v163
    %171 = vadd.xlane.f32.xlu0 %v169
    %v172 = vpop.xlane.xlu0 %171
    %173 = vadd.xlane.f32.xlu0 %v170
    %v174 = vpop.xlane.xlu0 %173
    %v175 = vmul.f32 %v166, 0.03125
    %v176 = vmul.f32 %v168, 0.03125
    %v177 = vmul.f32 %v172, 0.03125
    %v178 = vmul.f32 %v174, 0.03125
    %v179 = vmul.f32 %v175, %v175
    %v180 = vmul.f32 %v176, %v176
    %v181 = vsub.f32 %v177, %v179
    %v182 = vsub.f32 %v178, %v180
    %v183 = vmax.f32 %v181, 0.0
    %v184 = vmax.f32 %v182, 0.0
    %v185 = vsub.f32 %v160, %v175
    %v186 = vsub.f32 %v163, %v176
    %v187 = vadd.f32 %v183, 1e-05
    %v188 = vadd.f32 %v184, 1e-05
    %v189 = vrsqrt.pop %v187
    %v190 = vmul.f32 %v189, %v187
    %v191 = vmul.f32 %v190, %v189
    %v192 = vmul.f32 0.5, %v191
    %v193 = vsub.f32 1.5, %v192
    %v194 = vmul.f32 %v189, %v193
    %vm195 = vweird.f32 %v187
    %vm196 = vweird.f32 %v189
    %vm197 = vmor %vm195, %vm196
    %v198 = vsel %vm197, %v189, %v194
    %v199 = vrsqrt.pop %v188
    %v200 = vmul.f32 %v199, %v188
    %v201 = vmul.f32 %v200, %v199
    %v202 = vmul.f32 0.5, %v201
    %v203 = vsub.f32 1.5, %v202
    %v204 = vmul.f32 %v199, %v203
    %vm205 = vweird.f32 %v188
    %vm206 = vweird.f32 %v199
    %vm207 = vmor %vm205, %vm206
    %v208 = vsel %vm207, %v199, %v204
    %v209 = vmul.f32 %v185, %v198
    %v210 = vmul.f32 %v186, %v208
    %v211 = vperm.slane %v140, 1
    %v212 = vmul.f32 %v209, %v211
    %v213 = vmul.f32 %v210, %v211
    %v214 = vperm.slane %v140, 2
    %v215 = vadd.f32 %v212, %v214
    %v216 = vadd.f32 %v213, %v214
    %v217 = vmax.f32 %v215, 0.0
    %v218 = vmax.f32 %v216, 0.0
    %s219 = scalar_lea.vmem [#allocation2], 128
    %v220 = vld [vmem:[%s219] sm:$0xff]
    %v221 = vld [vmem:[%s219 + $0x8] sm:$0xff]
    %v222 = vld [vmem:[%s219 + $0x10] sm:$0xff]
    %v223 = vld [vmem:[%s219 + $0x18] sm:$0xff]
    %v224 = vld [vmem:[%s219 + $0x20] sm:$0xff]
    %v225 = vld [vmem:[%s219 + $0x28] sm:$0xff]
    %v226 = vld [vmem:[%s219 + $0x30] sm:$0xff]
    %v227 = vld [vmem:[%s219 + $0x38] sm:$0xff]
    %v228 = vld [vmem:[%s219 + $0x40] sm:$0xff]
    %v229 = vld [vmem:[%s219 + $0x48] sm:$0xff]
    %v230 = vld [vmem:[%s219 + $0x50] sm:$0xff]
    %v231 = vld [vmem:[%s219 + $0x58] sm:$0xff]
    %v232 = vld [vmem:[%s219 + $0x60] sm:$0xff]
    %v233 = vld [vmem:[%s219 + $0x68] sm:$0xff]
    %v234 = vld [vmem:[%s219 + $0x70] sm:$0xff]
    %v235 = vld [vmem:[%s219 + $0x78] sm:$0xff]
    %s236 = scalar_lea.vmem %s3, 16
    %v237 = vld [vmem:[%s236] sm:$0xff]
    %v238 = vperm.slane %v237, 0
    %239 = vmatpush.msra.mxu0 %v235
    %240 = vmatpush.msra.mxu0 %v234
    %241 = vmatpush.msra.mxu0 %v233
    %242 = vmatpush.msra.mxu0 %v232
    %243 = vmatpush.msra.mxu0 %v231
    %244 = vmatpush.msra.mxu0 %v230
    %245 = vmatpush.msra.mxu0 %v229
    %246 = vmatpush.msra.mxu0 %v228
    %247 = vmatpush.msra.mxu0 %v227
    %248 = vmatpush.msra.mxu0 %v226
    %249 = vmatpush.msra.mxu0 %v225
    %250 = vmatpush.msra.mxu0 %v224
    %251 = vmatpush.msra.mxu0 %v223
    %252 = vmatpush.msra.mxu0 %v222
    %253 = vmatpush.msra.mxu0 %v221
    %254 = vmatpush.msra.mxu0 %v220
    %255 = vmatmul.f32.gmra.mxu0 %v217
    %v256 = vpop.f32.mrf.mxu0
    %v257 = vadd.f32 %v238, %v256
    %258 = vmatmul.f32.gmra.mxu0 %v218
    %v259 = vpop.f32.mrf.mxu0
    %v260 = vadd.f32 %v238, %v259
    %261 = vdwg.mxu0
    %262 = vadd.xlane.f32.xlu0 %v257
    %v263 = vpop.xlane.xlu0 %262
    %264 = vadd.xlane.f32.xlu0 %v260
    %v265 = vpop.xlane.xlu0 %264
    %v266 = vmul.f32 %v257, %v257
    %v267 = vmul.f32 %v260, %v260
    %268 = vadd.xlane.f32.xlu0 %v266
    %v269 = vpop.xlane.xlu0 %268
    %270 = vadd.xlane.f32.xlu0 %v267
    %v271 = vpop.xlane.xlu0 %270
    %v272 = vmul.f32 %v263, 0.03125
    %v273 = vmul.f32 %v265, 0.03125
    %v274 = vmul.f32 %v269, 0.03125
    %v275 = vmul.f32 %v271, 0.03125
    %v276 = vmul.f32 %v272, %v272
    %v277 = vmul.f32 %v273, %v273
    %v278 = vsub.f32 %v274, %v276
    %v279 = vsub.f32 %v275, %v277
    %v280 = vmax.f32 %v278, 0.0
    %v281 = vmax.f32 %v279, 0.0
    %v282 = vsub.f32 %v257, %v272
    %v283 = vsub.f32 %v260, %v273
    %v284 = vadd.f32 %v280, 1e-05
    %v285 = vadd.f32 %v281, 1e-05
    %v286 = vrsqrt.pop %v284
    %v287 = vmul.f32 %v286, %v284
    %v288 = vmul.f32 %v287, %v286
    %v289 = vmul.f32 0.5, %v288
    %v290 = vsub.f32 1.5, %v289
    %v291 = vmul.f32 %v286, %v290
    %vm292 = vweird.f32 %v284
    %vm293 = vweird.f32 %v286
    %vm294 = vmor %vm292, %vm293
    %v295 = vsel %vm294, %v286, %v291
    %v296 = vrsqrt.pop %v285
    %v297 = vmul.f32 %v296, %v285
    %v298 = vmul.f32 %v297, %v296
    %v299 = vmul.f32 0.5, %v298
    %v300 = vsub.f32 1.5, %v299
    %v301 = vmul.f32 %v296, %v300
    %vm302 = vweird.f32 %v285
    %vm303 = vweird.f32 %v296
    %vm304 = vmor %vm302, %vm303
    %v305 = vsel %vm304, %v296, %v301
    %v306 = vmul.f32 %v282, %v295
    %v307 = vmul.f32 %v283, %v305
    %v308 = vperm.slane %v237, 1
    %v309 = vmul.f32 %v306, %v308
    %v310 = vmul.f32 %v307, %v308
    %v311 = vperm.slane %v237, 2
    %v312 = vadd.f32 %v309, %v311
    %v313 = vadd.f32 %v310, %v311
    %v314 = vmax.f32 %v312, 0.0
    %v315 = vmax.f32 %v313, 0.0
    %vm316 = vcmask 261120
    %317 = vst.msk [vmem:[#allocation5] sm:$0xff] %vm316, %v314
    %318 = vst.msk [vmem:[#allocation5 + $0x8] sm:$0xff] %vm316, %v315
    // Predicated region
    $region22: #{_mlp_forward_impl.1} parent=1 // pred_check
      _
    $region23: #{_mlp_forward_impl.1} parent=1 // pred_check_branch
      %320 = sbr.rel (0) target = $region25
    $region24: #{_mlp_forward_impl.1} parent=1 // pred_region
      %322 = vsyncadd [#allocation4], 0
      %s323 = sshll.u32 [#allocation5], 4
      %s324 = int_to_ptr.vmem [resolvable:$true] %s323
      %s325 = sshll.u32 %s4, 4
      %s326 = int_to_ptr.hbm [resolvable:$true] %s325
      %331 = dma.vmem_to_hbm [thread:$0]  %s324, 256, %s326, [#allocation4], 128, 128, 8
    $region25: #{_mlp_forward_impl.1} parent=1 // pred_fallthru
      _
    // Predicated region
    $region26: #{_mlp_forward_impl.1} parent=1 // pred_check
      _
    $region27: #{_mlp_forward_impl.1} parent=1 // pred_check_branch
      %333 = sbr.rel (0) target = $region29
    $region28: #{_mlp_forward_impl.1} parent=1 // pred_region
      %335 = dma.done [#allocation4], 256
    $region29: #{_mlp_forward_impl.1} parent=1 // pred_fallthru
      _
    %336 = vsyncpa [#allocation3], 1
    %337 = vsyncpa [#allocation4], 1

</llo_original>
